<compile_context>
chip_gen: v5e
topology: v5e:2x2
jax: 0.10.0
libtpu: 0.0.40
codegen_flags: <defaults>
</compile_context>

<pallas_src>
import math
import functools
from typing import NamedTuple, Optional

import jax
import jax.numpy as jnp
from jax.experimental import pallas as pl
from jax.experimental.pallas import tpu as pltpu


# ----------------------------- small helpers --------------------------------

def _round_up(x, m):
    return ((x + m - 1) // m) * m


def _cdiv(a, b):
    return (a + b - 1) // b


def _gelu_new(x):
    # 'gelu_new' / NewGELU (tanh approximation), computed in f32.
    c = math.sqrt(2.0 / math.pi)
    return 0.5 * x * (1.0 + jnp.tanh(c * (x + 0.044715 * (x * x * x))))


@functools.lru_cache(maxsize=None)
def _vmem_capacity_bytes():
    """Per-TensorCore VMEM capacity; conservative 64 MiB fallback (v7x-sized)."""
    try:
        v = int(pltpu.get_tpu_info().vmem_capacity_bytes)
        if v > 0:
            return v
    except Exception:
        pass
    try:
        kind = jax.devices()[0].device_kind.lower()
        if any(k in kind for k in ("v4", "v5", "v6")):
            return 128 * 1024 * 1024
    except Exception:
        pass
    return 64 * 1024 * 1024


@functools.lru_cache(maxsize=None)
def _tensorcores_per_chip():
    """Best-effort TC count (v7x has 2); only used to keep the m axis >= 2 tiles."""
    try:
        info = pltpu.get_tpu_info()
        for name in ("num_tensorcores", "tensorcore_count", "num_cores",
                     "cores_per_chip", "num_cores_per_chip"):
            v = getattr(info, name, None)
            if v:
                return int(v)
    except Exception:
        pass
    try:
        kind = jax.devices()[0].device_kind.lower()
        if "v4" in kind or "v5p" in kind or "7" in kind:
            return 2
    except Exception:
        pass
    return 1


def _choose_tile(total, target, align):
    """Largest tile (multiple of `align`, <= target) minimizing zero padding of
    `total`; tiles below target//2 are not considered (keeps per-step work big)."""
    total = _round_up(max(total, 1), align)
    max_t = min(_round_up(target, align), total)
    min_t = max(align, _round_up(max(max_t // 2, 1), align))
    best_t = max_t
    best_pad = _cdiv(total, max_t) * max_t - total
    t = max_t - align
    while t >= min_t and best_pad > 0:
        pad = _cdiv(total, t) * t - total
        if pad < best_pad:
            best_pad, best_t = pad, t
        t -= align
    return best_t


def _pick_targets(E_p, O_p, out_itemsize, vmem_bytes):
    """Pick (tm_target, tf_target, vmem_limit) so double-buffered tiles fit VMEM."""
    budget = int(vmem_bytes * 0.75)            # leave compiler headroom
    tm = 1024 if vmem_bytes >= 96 * 1024 * 1024 else 512
    tf = 512

    def vmem_need(tm_, tf_):
        return (2 * tm_ * E_p * 2              # x tile (2x buffered, bf16)
                + 2 * E_p * tf_ * 2            # W_in tile
                + 2 * tf_ * O_p * 2            # W_out tile
                + 2 * tm_ * O_p * out_itemsize  # out tile
                + tm_ * O_p * 4)               # f32 accumulator

    while vmem_need(tm, tf) > budget and tf > 256:
        tf //= 2
    while vmem_need(tm, tf) > budget and tm > 256:
        tm //= 2

    vmem_limit = min(vmem_bytes,
                     max(budget, int(vmem_need(tm, tf) * 1.2),
                         32 * 1024 * 1024))
    return tm, tf, vmem_limit


# ----------------------------- weight preparation ----------------------------

class PreparedFFN(NamedTuple):
    w1: jax.Array            # (E_p, F_p) bf16, [in, out]
    w2: jax.Array            # (F_p, O_p) bf16, [in, out]
    embed_dim: int
    ff_dim: int
    output_dim: int
    tm_target: int
    tf: int
    vmem_limit: int
    out_dtype: Optional[object]   # None -> follow x.dtype


def prepare_ffn(w_in, w_out, *, out_dtype=None, vmem_bytes=None):
    """One-time weight prep (do this at model-load time, NOT per forward).

    w_in:  [embed_dim, ff_dim]   (pre-transposed vs torch nn.Linear)
    w_out: [ff_dim, output_dim]
    Casts to bf16 and zero-pads to the tile plan; already-aligned bf16 weights
    are passed through untouched.
    """
    E, F = w_in.shape
    F2, O = w_out.shape
    assert F2 == F, "w_in/w_out ff_dim mismatch"
    if vmem_bytes is None:
        vmem_bytes = _vmem_capacity_bytes()
    out_dt = jnp.dtype(out_dtype) if out_dtype is not None else None

    E_p = _round_up(E, 128)
    O_p = _round_up(O, 128)
    out_itemsize = out_dt.itemsize if out_dt is not None else 4   # conservative
    tm_target, tf_target, vmem_limit = _pick_targets(E_p, O_p, out_itemsize,
                                                     vmem_bytes)

    # ff-dim tile: 128-multiple minimizing zero padding of round_up(F, 128).
    tf = _choose_tile(F, tf_target, 128)
    F_p = _cdiv(_round_up(F, 128), tf) * tf

    cd = jnp.bfloat16
    if (E, F) == (E_p, F_p) and w_in.dtype == cd:
        w1 = w_in                                   # aligned fast path
    else:
        w1 = jnp.zeros((E_p, F_p), cd).at[:E, :F].set(w_in.astype(cd))
    if (F, O) == (F_p, O_p) and w_out.dtype == cd:
        w2 = w_out                                  # aligned fast path
    else:
        w2 = jnp.zeros((F_p, O_p), cd).at[:F, :O].set(w_out.astype(cd))

    return PreparedFFN(w1, w2, E, F, O, tm_target, tf, vmem_limit, out_dt)


# --------------------------------- kernel ------------------------------------

def _ffn_kernel(x_ref, w1_ref, w2_ref, o_ref, acc_ref):
    # x_ref:  (tm, E_p)   bf16 token tile (resident across the f axis)
    # w1_ref: (E_p, tf)   bf16 W_in tile
    # w2_ref: (tf, O_p)   bf16 W_out tile
    # o_ref:  (tm, O_p)   output tile
    # acc_ref:(tm, O_p)   f32 accumulator, resident across the f (reduction) axis
    f = pl.program_id(1)

    @pl.when(f == 0)
    def _():
        acc_ref[...] = jnp.zeros_like(acc_ref)

    # First matmul: bf16 x bf16 -> f32 on the MXU.
    h = jnp.dot(x_ref[...], w1_ref[...], preferred_element_type=jnp.float32)
    # GELU elementwise in f32 (tanh runs on the EUP slot).
    h = _gelu_new(h)
    # Second matmul on this ff-slice, accumulate into the resident f32 output.
    acc_ref[...] += jnp.dot(h.astype(w2_ref.dtype), w2_ref[...],
                            preferred_element_type=jnp.float32)

    @pl.when(f == pl.num_programs(1) - 1)
    def _():
        o_ref[...] = acc_ref[...].astype(o_ref.dtype)


# ------------------------------- hot path ------------------------------------

@functools.partial(
    jax.jit,
    static_argnames=("embed_dim", "output_dim", "tm", "tf", "out_dtype",
                     "vmem_limit"))
def _ffn_forward(x, w1, w2, *, embed_dim, output_dim, tm, tf, out_dtype,
                 vmem_limit):
    E, O = embed_dim, output_dim
    E_p, F_p = w1.shape
    O_p = w2.shape[1]
    orig_shape = x.shape

    x2d = x.reshape(-1, E)
    M = x2d.shape[0]
    M_p = _cdiv(M, tm) * tm

    cd = jnp.bfloat16
    xc = x2d.astype(cd)
    if (M, E) != (M_p, E_p):
        # Zero padding is exact: padded E columns / M rows contribute nothing.
        x_p = jnp.zeros((M_p, E_p), cd).at[:M, :E].set(xc)
    else:
        x_p = xc                                    # aligned fast path: no copy

    n_m = M_p // tm
    n_f = F_p // tf

    cost = pl.CostEstimate(
        flops=2 * M_p * E_p * F_p + 2 * M_p * F_p * O_p,
        transcendentals=M_p * F_p,
        bytes_accessed=(M_p * E_p * 2
                        + n_m * (E_p * F_p + F_p * O_p) * 2
                        + M_p * O_p * jnp.dtype(out_dtype).itemsize),
    )

    out = pl.pallas_call(
        _ffn_kernel,
        out_shape=jax.ShapeDtypeStruct((M_p, O_p), out_dtype),
        grid_spec=pltpu.PrefetchScalarGridSpec(
            num_scalar_prefetch=0,
            grid=(n_m, n_f),
            in_specs=[
                pl.BlockSpec((tm, E_p), lambda m, f: (m, 0)),    # x tile
                pl.BlockSpec((E_p, tf), lambda m, f: (0, f)),    # W_in tile
                pl.BlockSpec((tf, O_p), lambda m, f: (f, 0)),    # W_out tile
            ],
            out_specs=pl.BlockSpec((tm, O_p), lambda m, f: (m, 0)),
            scratch_shapes=[pltpu.VMEM((tm, O_p), jnp.float32)],
        ),
        compiler_params=pltpu.CompilerParams(
            dimension_semantics=("parallel", "arbitrary"),
            vmem_limit_bytes=vmem_limit,
        ),
        cost_estimate=cost,
    )(x_p, w1, w2)

    if (M, O) != (M_p, O_p):
        out = out[:M, :O]                           # only when actually padded
    return out.reshape(*orig_shape[:-1], O)


def ffn_apply(x, prep: PreparedFFN):
    """Hot-path forward. `prep` comes from prepare_ffn (weights already padded)."""
    assert x.shape[-1] == prep.embed_dim
    out_dtype = prep.out_dtype if prep.out_dtype is not None else jnp.dtype(x.dtype)

    M = 1
    for d in x.shape[:-1]:
        M *= d
    M_16 = _round_up(max(M, 1), 16)        # bf16 packs 2 rows per sublane

    tm_cap = prep.tm_target
    if _tensorcores_per_chip() >= 2 and M_16 >= 512:
        # Keep >= 2 token tiles so both TensorCores (v7x) get work on the
        # "parallel" m axis.
        tm_cap = min(tm_cap, _round_up(_cdiv(M_16, 2), 16))

    if M_16 <= tm_cap:
        tm = M_16
    else:
        tm = _choose_tile(M_16, tm_cap, 16)   # minimize token-axis padding

    return _ffn_forward(x, prep.w1, prep.w2,
                        embed_dim=prep.embed_dim, output_dim=prep.output_dim,
                        tm=tm, tf=prep.tf, out_dtype=out_dtype,
                        vmem_limit=prep.vmem_limit)


def ffn_pallas(x, w_in, w_out, *, out_dtype=None):
    """Convenience one-shot wrapper (pads/casts weights on the fly).
    For repeated calls, use prepare_ffn() once and ffn_apply() in the loop."""
    return ffn_apply(x, prepare_ffn(w_in, w_out, out_dtype=out_dtype))


# --------------------------------- test --------------------------------------

if __name__ == "__main__":
    # Small shapes consistent with the module: (batch, seq, embed_dim).
    batch, seq, embed_dim, ff_dim, output_dim = 2, 8, 32, 64, 32

    key = jax.random.PRNGKey(0)
    kx, k1, k2 = jax.random.split(key, 3)

    x = jax.random.normal(kx, (batch, seq, embed_dim), dtype=jnp.float32)
    # Deterministic weight init (trunc_normal_-style, scale 0.02), stored [in, out].
    w_in = (0.02 * jax.random.truncated_normal(
        k1, -2.0, 2.0, (embed_dim, ff_dim))).astype(jnp.float32)
    w_out = (0.02 * jax.random.truncated_normal(
        k2, -2.0, 2.0, (ff_dim, output_dim))).astype(jnp.float32)

    # One-time weight prep (outside the hot path), then the hot-path forward.
    prep = prepare_ffn(w_in, w_out)
    y = ffn_apply(x, prep)
    y = jax.block_until_ready(y)
    assert y.shape == (batch, seq, output_dim)

    # Second call exercises the cached compiled hot path with prepared weights.
    y2 = jax.block_until_ready(ffn_apply(x, prep))
    assert jnp.array_equal(y, y2)

    # Pure-JAX f32 reference of the forward semantics (kernel uses bf16
    # operands with f32 accumulation, so tolerance is widened accordingly).
    h_ref = x.reshape(-1, embed_dim) @ w_in
    h_ref = _gelu_new(h_ref)
    y_ref = (h_ref @ w_out).reshape(batch, seq, output_dim)
    assert jnp.allclose(y, y_ref, atol=1e-3, rtol=2e-2), "mismatch vs reference"

    print("KERNEL_OK")
</pallas_src>

<mosaic_0001>
module attributes {stable_mosaic.version = 11 : i64} {
  func.func @_ffn_kernel(%arg0: i32, %arg1: i32, %arg2: memref<16x128xbf16, #tpu.memory_space<vmem>>, %arg3: memref<128x128xbf16, #tpu.memory_space<vmem>>, %arg4: memref<128x128xbf16, #tpu.memory_space<vmem>>, %arg5: memref<16x128xf32, #tpu.memory_space<vmem>>, %arg6: memref<16x128xf32, #tpu.memory_space<vmem>>) attributes {dimension_semantics = [#tpu.dimension_semantics<parallel>, #tpu.dimension_semantics<arbitrary>], iteration_bounds = array<i64: 1, 1>, scalar_prefetch = 0 : i64, scratch_operands = 1 : i64, tpu.core_type = #tpu.core_type<tc>, window_params = [{transform_indices = @transform_0, window_bounds = array<i64: 16, 128>}, {transform_indices = @transform_1, window_bounds = array<i64: 128, 128>}, {transform_indices = @transform_2, window_bounds = array<i64: 128, 128>}, {transform_indices = @transform_3, window_bounds = array<i64: 16, 128>}]} {
    %c0_i32 = arith.constant 0 : i32
    %0 = arith.cmpi eq, %arg1, %c0_i32 : i32
    %1 = arith.extui %0 : i1 to i32
    %c0_i32_0 = arith.constant 0 : i32
    %2 = arith.cmpi ne, %1, %c0_i32_0 : i32
    scf.if %2 {
      %cst_17 = arith.constant 0.000000e+00 : f32
      %28 = vector.broadcast %cst_17 : f32 to vector<16x128xf32>
      %c0_18 = arith.constant 0 : index
      %c0_19 = arith.constant 0 : index
      %29 = vector.load %arg6[%c0_18, %c0_19] : memref<16x128xf32, #tpu.memory_space<vmem>>, vector<16x128xf32>
      tpu.vector_store %arg6[%c0_18, %c0_19], %28 {strides = array<i32>} : memref<16x128xf32, #tpu.memory_space<vmem>>, vector<16x128xf32>,
    } else {
    }
    %c0 = arith.constant 0 : index
    %c0_1 = arith.constant 0 : index
    %3 = vector.load %arg2[%c0, %c0_1] : memref<16x128xbf16, #tpu.memory_space<vmem>>, vector<16x128xbf16>
    %c0_2 = arith.constant 0 : index
    %c0_3 = arith.constant 0 : index
    %4 = vector.load %arg3[%c0_2, %c0_3] : memref<128x128xbf16, #tpu.memory_space<vmem>>, vector<128x128xbf16>
    %cst = arith.constant dense<0.000000e+00> : vector<16x128xf32>
    %5 = tpu.matmul %3, %4, %cst {dimension_numbers = #tpu.dot_dimension_numbers<[1], [0], [0], [1], [0, 0, 1, 1], [], []>} : vector<16x128xbf16>, vector<128x128xbf16>, vector<16x128xf32> -> vector<16x128xf32>
    %cst_4 = arith.constant 5.000000e-01 : f32
    %6 = vector.broadcast %cst_4 : f32 to vector<16x128xf32>
    %7 = arith.mulf %6, %5 : vector<16x128xf32>
    %8 = arith.mulf %5, %5 : vector<16x128xf32>
    %9 = arith.mulf %8, %5 : vector<16x128xf32>
    %cst_5 = arith.constant 4.471500e-02 : f32
    %10 = vector.broadcast %cst_5 : f32 to vector<16x128xf32>
    %11 = arith.mulf %10, %9 : vector<16x128xf32>
    %12 = arith.addf %5, %11 : vector<16x128xf32>
    %cst_6 = arith.constant 0.797884583 : f32
    %13 = vector.broadcast %cst_6 : f32 to vector<16x128xf32>
    %14 = arith.mulf %13, %12 : vector<16x128xf32>
    %15 = math.tanh %14 : vector<16x128xf32>
    %cst_7 = arith.constant 1.000000e+00 : f32
    %16 = vector.broadcast %cst_7 : f32 to vector<16x128xf32>
    %17 = arith.addf %16, %15 : vector<16x128xf32>
    %18 = arith.mulf %7, %17 : vector<16x128xf32>
    %c0_8 = arith.constant 0 : index
    %c0_9 = arith.constant 0 : index
    %19 = vector.load %arg6[%c0_8, %c0_9] : memref<16x128xf32, #tpu.memory_space<vmem>>, vector<16x128xf32>
    %20 = arith.truncf %18 : vector<16x128xf32> to vector<16x128xbf16>
    %c0_10 = arith.constant 0 : index
    %c0_11 = arith.constant 0 : index
    %21 = vector.load %arg4[%c0_10, %c0_11] : memref<128x128xbf16, #tpu.memory_space<vmem>>, vector<128x128xbf16>
    %cst_12 = arith.constant dense<0.000000e+00> : vector<16x128xf32>
    %22 = tpu.matmul %20, %21, %cst_12 {dimension_numbers = #tpu.dot_dimension_numbers<[1], [0], [0], [1], [0, 0, 1, 1], [], []>} : vector<16x128xbf16>, vector<128x128xbf16>, vector<16x128xf32> -> vector<16x128xf32>
    %23 = arith.addf %19, %22 : vector<16x128xf32>
    %c0_13 = arith.constant 0 : index
    %c0_14 = arith.constant 0 : index
    %24 = vector.load %arg6[%c0_13, %c0_14] : memref<16x128xf32, #tpu.memory_space<vmem>>, vector<16x128xf32>
    tpu.vector_store %arg6[%c0_13, %c0_14], %23 {strides = array<i32>} : memref<16x128xf32, #tpu.memory_space<vmem>>, vector<16x128xf32>,
    %c0_i32_15 = arith.constant 0 : i32
    %25 = arith.cmpi eq, %arg1, %c0_i32_15 : i32
    %26 = arith.extui %25 : i1 to i32
    %c0_i32_16 = arith.constant 0 : i32
    %27 = arith.cmpi ne, %26, %c0_i32_16 : i32
    scf.if %27 {
      %c0_17 = arith.constant 0 : index
      %c0_18 = arith.constant 0 : index
      %28 = vector.load %arg6[%c0_17, %c0_18] : memref<16x128xf32, #tpu.memory_space<vmem>>, vector<16x128xf32>
      %c0_19 = arith.constant 0 : index
      %c0_20 = arith.constant 0 : index
      %29 = vector.load %arg5[%c0_19, %c0_20] : memref<16x128xf32, #tpu.memory_space<vmem>>, vector<16x128xf32>
      tpu.vector_store %arg5[%c0_19, %c0_20], %28 {strides = array<i32>} : memref<16x128xf32, #tpu.memory_space<vmem>>, vector<16x128xf32>,
    } else {
    }
    return
  }
  func.func @transform_0(%arg0: i32, %arg1: i32) -> (i32, i32) {
    %c0_i32 = arith.constant 0 : i32
    %c0_i32_0 = arith.constant 0 : i32
    return %arg0, %c0_i32 : i32, i32
  }
  func.func @transform_1(%arg0: i32, %arg1: i32) -> (i32, i32) {
    %c0_i32 = arith.constant 0 : i32
    %c0_i32_0 = arith.constant 0 : i32
    return %c0_i32, %arg1 : i32, i32
  }
  func.func @transform_2(%arg0: i32, %arg1: i32) -> (i32, i32) {
    %c0_i32 = arith.constant 0 : i32
    %c0_i32_0 = arith.constant 0 : i32
    return %arg1, %c0_i32 : i32, i32
  }
  func.func @transform_3(%arg0: i32, %arg1: i32) -> (i32, i32) {
    %c0_i32 = arith.constant 0 : i32
    %c0_i32_0 = arith.constant 0 : i32
    return %arg0, %c0_i32 : i32, i32
  }
}

</mosaic_0001>

<llo_original>
// kernel: _ffn_forward.1
$region0: #{_ffn_forward.1}
  #allocation0 [shape = 'u32[]', space=smem, size = 0x4, offset = 0x4, fixed_abs, tag = 'smem constant byte address 0x4 - core index']
  #allocation1 [shape = 'u32[72,128]{1,0:T(1,128)}', space=vmem, size = 0x9000, scoped, tag = 'internal scratch']
  #allocation2 [shape = 'f32[16,128]{1,0:T(8,128)}', space=vmem, size = 0x2000, scoped, tag = 'scratch operand']
  %s0 = inlined_call_operand.vmem [shape: bf16[16,128], index: 0, kind: input, shape index: {}]
  %s1 = inlined_call_operand.hbm [shape: bf16[128,128], index: 1, kind: input, shape index: {}]
  %s2 = inlined_call_operand.hbm [shape: bf16[128,128], index: 2, kind: input, shape index: {}]
  %s3 = inlined_call_operand.vmem [shape: f32[16,128], index: 3, kind: output, shape index: {}]
  %s4 = sld [smem:[#allocation0]]
  $region38: #{_ffn_forward.1} parent=0
    _
  %s6 = ssub.s32 1, %s4
  %s7 = scalar_select 0, %s6, %s4
  $region1: #{_ffn_forward.1} parent=0
    #allocation3 [shape = 'u8[32768]{0}', space=vmem, size = 0x8000, scoped, tag = 'input window, operand 1, single buffered']
    #allocation4 [shape = 's32[1]{0}', space=sflag, size = 0x4, scoped, tag = 'scoped memory for _ffn_forward.1']
    #allocation5 [shape = 'u8[32768]{0}', space=vmem, size = 0x8000, scoped, tag = 'input window, operand 2, single buffered']
    #allocation6 [shape = 's32[1]{0}', space=sflag, size = 0x4, scoped, tag = 'scoped memory for _ffn_forward.1']
    %8 = vsyncpa [#allocation4], 0
    %9 = vsyncpa [#allocation6], 0
    // Predicated region
    $region2: #{_ffn_forward.1} parent=1 // pred_check
      _
    $region3: #{_ffn_forward.1} parent=1 // pred_check_branch
      %11 = sbr.rel (0) target = $region5
    $region4: #{_ffn_forward.1} parent=1 // pred_region
      _
    $region5: #{_ffn_forward.1} parent=1 // pred_fallthru
      _
    // Predicated region
    $region6: #{_ffn_forward.1} parent=1 // pred_check
      _
    $region7: #{_ffn_forward.1} parent=1 // pred_check_branch
      %13 = sbr.rel (0) target = $region9
    $region8: #{_ffn_forward.1} parent=1 // pred_region
      %15 = vsyncadd [#allocation4], 0
      %s16 = sshll.u32 %s1, 4
      %s17 = int_to_ptr.hbm [resolvable:$true] %s16
      %s18 = sshll.u32 [#allocation3], 4
      %s19 = int_to_ptr.vmem [resolvable:$true] %s18
      %24 = dma.hbm_to_vmem [thread:$0]  %s17, 1024, %s19, [#allocation4], 64, 64, 4
    $region9: #{_ffn_forward.1} parent=1 // pred_fallthru
      _
    // Predicated region
    $region10: #{_ffn_forward.1} parent=1 // pred_check
      _
    $region11: #{_ffn_forward.1} parent=1 // pred_check_branch
      %26 = sbr.rel (0) target = $region13
    $region12: #{_ffn_forward.1} parent=1 // pred_region
      %28 = vsyncadd [#allocation6], 0
      %s29 = sshll.u32 %s2, 4
      %s30 = int_to_ptr.hbm [resolvable:$true] %s29
      %s31 = sshll.u32 [#allocation5], 4
      %s32 = int_to_ptr.vmem [resolvable:$true] %s31
      %37 = dma.hbm_to_vmem [thread:$0]  %s30, 1024, %s32, [#allocation6], 64, 64, 4
    $region13: #{_ffn_forward.1} parent=1 // pred_fallthru
      _
    // Predicated region
    $region14: #{_ffn_forward.1} parent=1 // pred_check
      _
    $region15: #{_ffn_forward.1} parent=1 // pred_check_branch
      %39 = sbr.rel (0) target = $region17
    $region16: #{_ffn_forward.1} parent=1 // pred_region
      %41 = dma.done [#allocation4], 1024
    $region17: #{_ffn_forward.1} parent=1 // pred_fallthru
      _
    // Predicated region
    $region18: #{_ffn_forward.1} parent=1 // pred_check
      _
    $region19: #{_ffn_forward.1} parent=1 // pred_check_branch
      %43 = sbr.rel (0) target = $region21
    $region20: #{_ffn_forward.1} parent=1 // pred_region
      %45 = dma.done [#allocation6], 1024
    $region21: #{_ffn_forward.1} parent=1 // pred_fallthru
      _
    %p46 = scmp.eq.s32.totalorder 0, 0
    // Predicated region
    $region22: #{_ffn_forward.1} parent=1 // pred_check
      %p47 = pneg %p46
    $region23: #{_ffn_forward.1} parent=1 // pred_check_branch
      %49 = sbr.rel (%p47) target = $region25
    $region24: #{_ffn_forward.1} parent=1 // pred_region
      %50 = vst [vmem:[#allocation2] sm:$0xff] 0.0
      %51 = vst [vmem:[#allocation2 + $0x8] sm:$0xff] 0.0
    $region25: #{_ffn_forward.1} parent=1 // pred_fallthru
      _
    %v52 = vld [vmem:[%s0] sm:$0xf]
    %v53 = vld [vmem:[%s0 + $0x4] sm:$0xf]
    %v54 = vld [vmem:[#allocation3] sm:$0xf]
    %v55 = vld [vmem:[#allocation3 + $0x4] sm:$0xf]
    %v56 = vld [vmem:[#allocation3 + $0x8] sm:$0xf]
    %v57 = vld [vmem:[#allocation3 + $0xc] sm:$0xf]
    %v58 = vld [vmem:[#allocation3 + $0x10] sm:$0xf]
    %v59 = vld [vmem:[#allocation3 + $0x14] sm:$0xf]
    %v60 = vld [vmem:[#allocation3 + $0x18] sm:$0xf]
    %v61 = vld [vmem:[#allocation3 + $0x1c] sm:$0xf]
    %v62 = vld [vmem:[#allocation3 + $0x20] sm:$0xf]
    %v63 = vld [vmem:[#allocation3 + $0x24] sm:$0xf]
    %v64 = vld [vmem:[#allocation3 + $0x28] sm:$0xf]
    %v65 = vld [vmem:[#allocation3 + $0x2c] sm:$0xf]
    %v66 = vld [vmem:[#allocation3 + $0x30] sm:$0xf]
    %v67 = vld [vmem:[#allocation3 + $0x34] sm:$0xf]
    %v68 = vld [vmem:[#allocation3 + $0x38] sm:$0xf]
    %v69 = vld [vmem:[#allocation3 + $0x3c] sm:$0xf]
    %v72 = vunpack.c.l.b16 %v52
    %v73 = vunpack.c.l.b16 %v53
    %v74 = vpack.c.b16 %v73, %v72
    %v92 = vunpack.c.l.b16 %v54
    %v93 = vunpack.c.l.b16 %v55
    %v94 = vunpack.c.l.b16 %v56
    %v95 = vunpack.c.l.b16 %v57
    %v96 = vunpack.c.l.b16 %v58
    %v97 = vunpack.c.l.b16 %v59
    %v98 = vunpack.c.l.b16 %v60
    %v99 = vunpack.c.l.b16 %v61
    %v100 = vunpack.c.l.b16 %v62
    %v101 = vunpack.c.l.b16 %v63
    %v102 = vunpack.c.l.b16 %v64
    %v103 = vunpack.c.l.b16 %v65
    %v104 = vunpack.c.l.b16 %v66
    %v105 = vunpack.c.l.b16 %v67
    %v106 = vunpack.c.l.b16 %v68
    %v107 = vunpack.c.l.b16 %v69
    %v108 = vpack.c.b16 %v93, %v92
    %v109 = vpack.c.b16 %v95, %v94
    %v110 = vpack.c.b16 %v97, %v96
    %v111 = vpack.c.b16 %v99, %v98
    %v112 = vpack.c.b16 %v101, %v100
    %v113 = vpack.c.b16 %v103, %v102
    %v114 = vpack.c.b16 %v105, %v104
    %v115 = vpack.c.b16 %v107, %v106
    %124 = vmatpush.bf16.msra.mxu0 %v115
    %125 = vmatpush.bf16.msra.mxu0 %v114
    %126 = vmatpush.bf16.msra.mxu0 %v113
    %127 = vmatpush.bf16.msra.mxu0 %v112
    %128 = vmatpush.bf16.msra.mxu0 %v111
    %129 = vmatpush.bf16.msra.mxu0 %v110
    %130 = vmatpush.bf16.msra.mxu0 %v109
    %131 = vmatpush.bf16.msra.mxu0 %v108
    %132 = vmatmul.bf16.gmra.mxu0 %v74
    %v133 = vpop.f32.mrf.mxu0
    %v134 = vadd.f32 0.0, %v133
    %v135 = vpop.f32.mrf.mxu0
    %v136 = vadd.f32 0.0, %v135
    %137 = vdwg.mxu0
    %v138 = vmul.f32 %v134, 0.5
    %v139 = vmul.f32 %v136, 0.5
    %v140 = vmul.f32 %v134, %v134
    %v141 = vmul.f32 %v136, %v136
    %v142 = vmul.f32 %v140, %v134
    %v143 = vmul.f32 %v141, %v136
    %v144 = vmul.f32 %v142, 0.044715
    %v145 = vmul.f32 %v143, 0.044715
    %v146 = vadd.f32 %v134, %v144
    %v147 = vadd.f32 %v136, %v145
    %v148 = vmul.f32 %v146, 0.7978846
    %v149 = vmul.f32 %v147, 0.7978846
    %v150 = vtanh.pop %v148
    %v151 = vtanh.pop %v149
    %v152 = vadd.f32 %v150, 1.0
    %v153 = vadd.f32 %v151, 1.0
    %v154 = vmul.f32 %v138, %v152
    %v155 = vmul.f32 %v139, %v153
    %v156 = vld [vmem:[#allocation2] sm:$0xff]
    %v157 = vld [vmem:[#allocation2 + $0x8] sm:$0xff]
    %v158 = vpack.c.bf16 %v155, %v154
    %v159 = vld [vmem:[#allocation5] sm:$0xf]
    %v160 = vld [vmem:[#allocation5 + $0x4] sm:$0xf]
    %v161 = vld [vmem:[#allocation5 + $0x8] sm:$0xf]
    %v162 = vld [vmem:[#allocation5 + $0xc] sm:$0xf]
    %v163 = vld [vmem:[#allocation5 + $0x10] sm:$0xf]
    %v164 = vld [vmem:[#allocation5 + $0x14] sm:$0xf]
    %v165 = vld [vmem:[#allocation5 + $0x18] sm:$0xf]
    %v166 = vld [vmem:[#allocation5 + $0x1c] sm:$0xf]
    %v167 = vld [vmem:[#allocation5 + $0x20] sm:$0xf]
    %v168 = vld [vmem:[#allocation5 + $0x24] sm:$0xf]
    %v169 = vld [vmem:[#allocation5 + $0x28] sm:$0xf]
    %v170 = vld [vmem:[#allocation5 + $0x2c] sm:$0xf]
    %v171 = vld [vmem:[#allocation5 + $0x30] sm:$0xf]
    %v172 = vld [vmem:[#allocation5 + $0x34] sm:$0xf]
    %v173 = vld [vmem:[#allocation5 + $0x38] sm:$0xf]
    %v174 = vld [vmem:[#allocation5 + $0x3c] sm:$0xf]
    %v191 = vunpack.c.l.b16 %v159
    %v192 = vunpack.c.l.b16 %v160
    %v193 = vunpack.c.l.b16 %v161
    %v194 = vunpack.c.l.b16 %v162
    %v195 = vunpack.c.l.b16 %v163
    %v196 = vunpack.c.l.b16 %v164
    %v197 = vunpack.c.l.b16 %v165
    %v198 = vunpack.c.l.b16 %v166
    %v199 = vunpack.c.l.b16 %v167
    %v200 = vunpack.c.l.b16 %v168
    %v201 = vunpack.c.l.b16 %v169
    %v202 = vunpack.c.l.b16 %v170
    %v203 = vunpack.c.l.b16 %v171
    %v204 = vunpack.c.l.b16 %v172
    %v205 = vunpack.c.l.b16 %v173
    %v206 = vunpack.c.l.b16 %v174
    %v207 = vpack.c.b16 %v192, %v191
    %v208 = vpack.c.b16 %v194, %v193
    %v209 = vpack.c.b16 %v196, %v195
    %v210 = vpack.c.b16 %v198, %v197
    %v211 = vpack.c.b16 %v200, %v199
    %v212 = vpack.c.b16 %v202, %v201
    %v213 = vpack.c.b16 %v204, %v203
    %v214 = vpack.c.b16 %v206, %v205
    %223 = vmatpush.bf16.msra.mxu0 %v214
    %224 = vmatpush.bf16.msra.mxu0 %v213
    %225 = vmatpush.bf16.msra.mxu0 %v212
    %226 = vmatpush.bf16.msra.mxu0 %v211
    %227 = vmatpush.bf16.msra.mxu0 %v210
    %228 = vmatpush.bf16.msra.mxu0 %v209
    %229 = vmatpush.bf16.msra.mxu0 %v208
    %230 = vmatpush.bf16.msra.mxu0 %v207
    %231 = vmatmul.bf16.gmra.mxu0 %v158
    %v232 = vpop.f32.mrf.mxu0
    %v233 = vadd.f32 0.0, %v232
    %v234 = vpop.f32.mrf.mxu0
    %v235 = vadd.f32 0.0, %v234
    %236 = vdwg.mxu0
    %v237 = vadd.f32 %v156, %v233
    %v238 = vadd.f32 %v157, %v235
    %239 = vst [vmem:[#allocation2] sm:$0xff] %v237
    %240 = vst [vmem:[#allocation2 + $0x8] sm:$0xff] %v238
    // Predicated region
    $region26: #{_ffn_forward.1} parent=1 // pred_check
      %p241 = pneg %p46
    $region27: #{_ffn_forward.1} parent=1 // pred_check_branch
      %243 = sbr.rel (%p241) target = $region29
    $region28: #{_ffn_forward.1} parent=1 // pred_region
      %v244 = vld [vmem:[#allocation2] sm:$0xff]
      %v245 = vld [vmem:[#allocation2 + $0x8] sm:$0xff]
      %246 = vst [vmem:[%s3] sm:$0xff] %v244
      %247 = vst [vmem:[%s3 + $0x8] sm:$0xff] %v245
    $region29: #{_ffn_forward.1} parent=1 // pred_fallthru
      _
    // Predicated region
    $region30: #{_ffn_forward.1} parent=1 // pred_check
      _
    $region31: #{_ffn_forward.1} parent=1 // pred_check_branch
      %249 = sbr.rel (0) target = $region33
    $region32: #{_ffn_forward.1} parent=1 // pred_region
      _
    $region33: #{_ffn_forward.1} parent=1 // pred_fallthru
      _
    // Predicated region
    $region34: #{_ffn_forward.1} parent=1 // pred_check
      _
    $region35: #{_ffn_forward.1} parent=1 // pred_check_branch
      %251 = sbr.rel (0) target = $region37
    $region36: #{_ffn_forward.1} parent=1 // pred_region
      _
    $region37: #{_ffn_forward.1} parent=1 // pred_fallthru
      _
    %252 = vsyncpa [#allocation4], 1
    %253 = vsyncpa [#allocation6], 1

</llo_original>
